<compile_context>
chip_gen: v5e
topology: v5e:2x2
jax: 0.10.0
libtpu: 0.0.40
codegen_flags: <defaults>
</compile_context>

<pallas_src>
import functools
import math

import jax
import jax.numpy as jnp
import numpy as np
from jax.experimental import pallas as pl
from jax.experimental.pallas import tpu as pltpu

# ---- config (deterministic, mirrors iBOTPatchLossConfig) --------------------
STUDENT_TEMP = 0.1
CENTER_MOMENTUM = 0.9
WARMUP_TEACHER_TEMP = 0.04
TEACHER_TEMP = 0.07
WARMUP_TEACHER_TEMP_STEPS = 10
TOTAL_STEPS = 100


def teacher_temp_schedule(step: int) -> float:
    """LinearWarmupCosineDecayScheduler(base=final=teacher_temp), host-side."""
    if step < WARMUP_TEACHER_TEMP_STEPS:
        return WARMUP_TEACHER_TEMP + (TEACHER_TEMP - WARMUP_TEACHER_TEMP) * (
            step / WARMUP_TEACHER_TEMP_STEPS
        )
    prog = (step - WARMUP_TEACHER_TEMP_STEPS) / max(
        1, TOTAL_STEPS - WARMUP_TEACHER_TEMP_STEPS
    )
    # base == final -> constant after warmup
    return TEACHER_TEMP + 0.5 * (TEACHER_TEMP - TEACHER_TEMP) * (
        1 + math.cos(math.pi * prog)
    )


# ---- per-generation tiling ---------------------------------------------------
def _vmem_capacity_bytes() -> int:
    try:
        info = pltpu.get_tpu_info()
        cap = getattr(info, "vmem_capacity_bytes", None)
        if cap:
            return int(cap)
    except Exception:
        pass
    return 64 * 1024 * 1024  # conservative: v7x per-TensorCore VMEM


def _select_token_tiling(T, hidden, in_dtype, max_tile_tokens=None):
    """Pick (tile_tokens, n_tiles, padded_T, needs_mask, vmem_limit_bytes)."""
    itemsize = jnp.dtype(in_dtype).itemsize
    sub = 8 if itemsize >= 4 else (16 if itemsize == 2 else 32)

    vmem_cap = _vmem_capacity_bytes()
    if vmem_cap >= 100 * 1024 * 1024:        # v5e / v6e: 128 MiB physical VMEM
        tp_cap, vmem_limit = 512, 96 * 1024 * 1024
    else:                                     # v7x: 64 MiB per TensorCore
        tp_cap, vmem_limit = 256, 48 * 1024 * 1024
    if max_tile_tokens is not None:
        tp_cap = max(sub, min(tp_cap, (int(max_tile_tokens) // sub) * sub))

    # Per-tile working set: double-buffered teacher+student inputs plus
    # ~2 concurrently-live f32 (tp, hidden) temporaries (t_exp + student_f32,
    # then the student shift/exp reuses that space).
    def working_set(tp):
        return 2 * 2 * tp * hidden * itemsize + 2 * tp * hidden * 4

    tp = tp_cap
    while tp > sub and working_set(tp) > int(0.75 * vmem_limit):
        tp = max(sub, ((tp // 2) // sub) * sub)

    if T <= tp:
        # Single tile: block extent equals the full token axis, no padding,
        # no in-kernel boundary masking.
        return T, 1, T, False, vmem_limit

    # Prefer a tile that divides T exactly (no padded boundary tile -> no
    # in-kernel select).  Only accept reasonably large divisors.
    for d in range(tp, sub - 1, -sub):
        if T % d == 0 and d >= max(sub, tp // 4):
            return d, T // d, T, False, vmem_limit

    n_p = -(-T // tp)
    return tp, n_p, n_p * tp, True, vmem_limit


# ---- kernel ------------------------------------------------------------------
def _ibot_kernel(
    inv_ttemp_ref,      # SMEM (1,)         scalar prefetch: 1 / teacher_temperature
    teacher_ref,        # VMEM (1, TP, D)   input dtype (bf16 / f32)
    student_ref,        # VMEM (1, TP, D)   input dtype
    mask_ref,           # VMEM (1, 1, 1, TP) 0/1 mask, lane-dense row
    center_ref,         # VMEM (1, D)       f32
    tok_ref,            # out  (1, 1, TP, 1) f32  per-token cross-entropy
    csum_ref,           # out  (1, 1, 1, D)  f32  masked teacher sum for this tile
    *,
    inv_student_temp,   # static float
    tokens_total,       # static int: true (unpadded) token count
    tile_tokens,        # static int: TP
    needs_mask,         # static bool: a padded boundary tile exists
    bf16_center_dot,    # static bool: feed bf16 operands to the center MXU dot
    student_exp_bf16,   # static bool: run the student exp in bf16 (v6e/v7x opt)
):
    inv_ttemp = inv_ttemp_ref[0]

    teacher_in = teacher_ref[0]          # (TP, D) input dtype
    mask_row = mask_ref[0, 0]            # (1, TP)
    center = center_ref[...]             # (1, D) f32

    if needs_mask:
        # Only reached when no tile size divides T; the wrapper prefers
        # divisor tiles so most shapes skip this select entirely.  Zero the
        # garbage rows of the padded boundary tile so the MXU center sum and
        # the teacher exp stay NaN-free (mask entries there are already 0,
        # but 0 * NaN would poison the dot).
        p = pl.program_id(1)
        tok_id = jax.lax.broadcasted_iota(jnp.int32, (tile_tokens, 1), 0)
        valid = (tok_id + p * tile_tokens) < tokens_total      # (TP, 1)
        teacher_in = jnp.where(valid, teacher_in, jnp.zeros_like(teacher_in))

    teacher_f32 = teacher_in.astype(jnp.float32)

    # ---- teacher pass: centered / temperature-scaled logits -> exp and Z_t.
    t = (teacher_f32 - center) * inv_ttemp
    t = t - jnp.max(t, axis=-1, keepdims=True)
    t_exp = jnp.exp(t)
    z_t = jnp.sum(t_exp, axis=-1, keepdims=True)               # (TP, 1)

    student_f32 = student_ref[0].astype(jnp.float32)            # (TP, D)
    # Consume t_exp NOW (before the student max/exp pass) so the full (TP, D)
    # f32 t_exp tile is dead afterwards -> lower peak VMEM / vreg pressure.
    a = jnp.sum(t_exp * student_f32, axis=-1, keepdims=True)    # (TP, 1)

    # ---- student pass (t_exp no longer live).
    s = student_f32 * inv_student_temp
    max_s = jnp.max(s, axis=-1, keepdims=True)
    s_shift = s - max_s
    if student_exp_bf16:
        # EUP micro-opt for v6e/v7x; do not enable on v5e (no bf16 EUP).
        exp_s = jnp.exp(s_shift.astype(jnp.bfloat16)).astype(jnp.float32)
    else:
        exp_s = jnp.exp(s_shift)
    log_z_s = jnp.log(jnp.sum(exp_s, axis=-1, keepdims=True))   # (TP, 1)

    # Fused cross entropy (no softmax / log-softmax materialisation):
    #   -sum(softmax(t) * log_softmax(s)) = max_s + logZ_s - <t_exp, s>/Z_t
    # with <t_exp, s> = inv_student_temp * <t_exp, student>.
    tok_loss = max_s + log_z_s - (inv_student_temp * a) * pl.reciprocal(
        z_t, approx=False
    )
    tok_ref[...] = tok_loss.reshape(tok_ref.shape)

    # Masked center statistic on the otherwise-idle MXU: (1, TP) @ (TP, D).
    if bf16_center_dot:
        # bf16 x bf16 single pass; bit-exact because the mask is 0/1.
        csum = jnp.dot(mask_row, teacher_in, preferred_element_type=jnp.float32)
    else:
        # Genuinely-f32 inputs: request full precision so the center sum does
        # not lose mantissa to a low-pass bf16 decomposition.
        csum = jnp.dot(
            mask_row,
            teacher_f32,
            preferred_element_type=jnp.float32,
            precision=jax.lax.Precision.HIGHEST,
        )
    csum_ref[...] = csum.reshape(csum_ref.shape)


# ---- wrapper -----------------------------------------------------------------
def ibot_patch_loss(
    teacher_global_output,   # (bsz, n_imgs, seq, D)  bf16 preferred (halves HBM)
    student_global_output,   # (bsz, n_imgs, seq, D)
    student_masks,           # (bsz, n_imgs, seq - 1) bool / float
    center,                  # (D,) f32 center buffer
    step: int = 0,
    teacher_temp=None,       # optional explicit temperature (may be traced)
    max_tile_tokens=None,    # optional cap on the token tile (testing / tuning)
    student_temp: float = STUDENT_TEMP,
    center_momentum: float = CENTER_MOMENTUM,
    student_exp_bf16: bool = False,
):
    bsz, n_imgs, seq, hidden = teacher_global_output.shape
    assert student_global_output.shape == teacher_global_output.shape
    assert student_masks.shape == (bsz, n_imgs, seq - 1)

    # Contiguous collapse (n_imgs, seq) -> T: metadata-only, no HBM copy, and
    # no wrapper-side astype of the big activations.
    T = n_imgs * seq
    act_dtype = teacher_global_output.dtype
    teacher_tok = teacher_global_output.reshape(bsz, T, hidden)
    student_tok = student_global_output.reshape(bsz, T, hidden)

    # CLS handling: a zero mask entry for each image's leading token is exactly
    # equivalent to the module's [:, :, 1:] slice (and identical to its
    # no_slice=True path) for both the loss and the center statistic.
    m = student_masks.astype(jnp.float32)
    mask_img = jnp.concatenate(
        [jnp.zeros((bsz, n_imgs, 1), jnp.float32), m], axis=2
    )                                                           # (bsz, n_imgs, seq)
    mask_w = jnp.maximum(jnp.sum(mask_img, axis=2, keepdims=True), 1.0)
    wmask_flat = (mask_img / mask_w).reshape(bsz, T)            # loss weights (XLA side)
    mask_flat = mask_img.reshape(bsz, T)                        # 0/1 mask (kernel side)
    total_masks = jnp.sum(mask_flat)
    n_loss_terms = bsz * n_imgs

    tp, n_p, t_pad, needs_mask, vmem_limit = _select_token_tiling(
        T, hidden, act_dtype, max_tile_tokens
    )
    # TODO(synk): for very large prototype dims (D >= ~32k, DINOv2-style heads)
    # the whole-row-in-VMEM design breaks on every generation; a D-chunked
    # online-softmax inner loop would be required.

    bf16_center_dot = jnp.dtype(act_dtype) == jnp.dtype(jnp.bfloat16)
    mask_dtype = jnp.bfloat16 if bf16_center_dot else jnp.float32
    mask_flat_k = (
        jnp.pad(mask_flat, ((0, 0), (0, t_pad - T))) if needs_mask else mask_flat
    )
    mask_tiles = mask_flat_k.reshape(bsz, n_p, 1, tp).astype(mask_dtype)

    if teacher_temp is None:
        teacher_temp = teacher_temp_schedule(int(step))
    inv_ttemp = (1.0 / jnp.asarray(teacher_temp, jnp.float32)).reshape(1)
    center2d = center.reshape(1, hidden).astype(jnp.float32)

    kernel = functools.partial(
        _ibot_kernel,
        inv_student_temp=float(1.0 / student_temp),
        tokens_total=T,
        tile_tokens=tp,
        needs_mask=needs_mask,
        bf16_center_dot=bool(bf16_center_dot),
        student_exp_bf16=bool(student_exp_bf16),
    )

    grid_spec = pltpu.PrefetchScalarGridSpec(
        num_scalar_prefetch=1,
        grid=(bsz, n_p),
        in_specs=[
            pl.BlockSpec((1, tp, hidden), lambda b, p, tt: (b, p, 0)),    # teacher
            pl.BlockSpec((1, tp, hidden), lambda b, p, tt: (b, p, 0)),    # student
            pl.BlockSpec((1, 1, 1, tp), lambda b, p, tt: (b, p, 0, 0)),   # mask row
            pl.BlockSpec((1, hidden), lambda b, p, tt: (0, 0)),           # center
        ],
        out_specs=[
            pl.BlockSpec((1, 1, tp, 1), lambda b, p, tt: (b, p, 0, 0)),   # tok loss
            pl.BlockSpec((1, 1, 1, hidden), lambda b, p, tt: (b, p, 0, 0)),  # csum
        ],
    )

    tok_part, csum_part = pl.pallas_call(
        kernel,
        out_shape=(
            jax.ShapeDtypeStruct((bsz, n_p, tp, 1), jnp.float32),
            jax.ShapeDtypeStruct((bsz, n_p, 1, hidden), jnp.float32),
        ),
        grid_spec=grid_spec,
        compiler_params=pltpu.CompilerParams(
            # Per-(b, p) partial outputs -> no cross-iteration state, so both
            # grid axes shard across TensorCores (uses v7x's 2nd core at bsz=1).
            dimension_semantics=("parallel", "parallel"),
            vmem_limit_bytes=vmem_limit,
        ),
    )(inv_ttemp, teacher_tok, student_tok, mask_tiles, center2d)

    # Tiny final reductions + EMA center update in plain XLA.
    tok_losses = tok_part.reshape(bsz, n_p * tp)[:, :T]   # drop padded garbage
    loss = jnp.sum(tok_losses * wmask_flat) / n_loss_terms
    # NOTE: matches the PyTorch module (no clamp) -- an all-zero mask batch
    # yields NaN batch_center, exactly like the reference implementation.
    batch_center = jnp.sum(csum_part, axis=(0, 1, 2)) / total_masks
    new_center = (
        center.astype(jnp.float32) * center_momentum
        + batch_center * (1.0 - center_momentum)
    )
    # TODO(synk): the module's `step` buffer increment and the distributed
    # all-reduce hooks are training-loop side effects handled outside this
    # functional kernel.
    return loss, new_center


# ---- pure-JAX reference ------------------------------------------------------
def reference(teacher, student, mask, center, ttemp, stemp, momentum):
    t = teacher[:, :, 1:].astype(jnp.float32)
    s = student[:, :, 1:].astype(jnp.float32) / stemp
    m = mask.astype(jnp.float32)
    bsz, n_imgs = m.shape[0], m.shape[1]
    tsm = jax.nn.softmax((t - center) / ttemp, axis=-1)
    log_sm = jax.nn.log_softmax(s, axis=-1)
    tok_loss = -jnp.sum(tsm * log_sm, axis=-1)
    mw = jnp.maximum(jnp.sum(m, axis=-1, keepdims=True), 1.0)
    loss = jnp.sum(tok_loss * m / mw) / (bsz * n_imgs)
    total_masks = jnp.sum(m)
    batch_center = jnp.sum(t * m[..., None], axis=(0, 1, 2)) / total_masks
    new_center = center * momentum + batch_center * (1.0 - momentum)
    return loss, new_center


if __name__ == "__main__":
    key = jax.random.PRNGKey(0)
    k1, k2, k3, k4, k5, k6 = jax.random.split(key, 6)

    def run_case(name, t, s, m, c, step, max_tile=None, tol=1e-4):
        loss, new_center = ibot_patch_loss(
            t, s, m, c, step=step, max_tile_tokens=max_tile
        )
        jax.block_until_ready((loss, new_center))
        ref_loss, ref_center = reference(
            t, s, m, c, teacher_temp_schedule(step), STUDENT_TEMP, CENTER_MOMENTUM
        )
        assert np.allclose(
            np.asarray(loss), np.asarray(ref_loss), rtol=tol, atol=tol
        ), (name, float(loss), float(ref_loss))
        assert np.allclose(
            np.asarray(new_center), np.asarray(ref_center), rtol=tol, atol=tol
        ), (name, "center mismatch")

    # Keep test data bf16-representable so the reference and kernel consume
    # identical values across dtype variants.
    def mk(keya, keyb, shape):
        a = jax.random.normal(keya, shape, jnp.float32)
        b = jax.random.normal(keyb, shape, jnp.float32)
        a = a.astype(jnp.bfloat16).astype(jnp.float32)
        b = b.astype(jnp.bfloat16).astype(jnp.float32)
        return a, b

    # ---- test 1: single-tile path (T <= tile), f32 inputs --------------------
    bsz, n_imgs, seq, D = 2, 2, 9, 32          # seq includes CLS; patches = 8
    t1, s1 = mk(k1, k2, (bsz, n_imgs, seq, D))
    m1 = (jax.random.uniform(k3, (bsz, n_imgs, seq - 1)) > 0.5).astype(jnp.float32)
    c1 = jnp.zeros((D,), jnp.float32)
    run_case("single_tile_f32", t1, s1, m1, c1, step=0)

    # ---- test 2: tiled token axis with a padded boundary tile, f32 -----------
    bsz2, n_imgs2, seq2, D2 = 2, 2, 81, 32     # T = 162 -> two 128-token tiles
    t2, s2 = mk(k4, k5, (bsz2, n_imgs2, seq2, D2))
    m2 = (jax.random.uniform(k6, (bsz2, n_imgs2, seq2 - 1)) > 0.5).astype(jnp.float32)
    c2 = 0.01 * jnp.arange(D2, dtype=jnp.float32)
    run_case("padded_tiles_f32", t2, s2, m2, c2, step=7, max_tile=128)

    # ---- test 3: bf16 activations straight into the kernel, single tile ------
    run_case(
        "single_tile_bf16",
        t1.astype(jnp.bfloat16), s1.astype(jnp.bfloat16), m1, c1, step=0,
    )

    # ---- test 4: bf16 activations, padded boundary tile (bf16 MXU center sum)
    run_case(
        "padded_tiles_bf16",
        t2.astype(jnp.bfloat16), s2.astype(jnp.bfloat16), m2, c2,
        step=7, max_tile=128,
    )

    # ---- test 5: multi-tile with a tile that divides T exactly (no padding) --
    bsz3, n_imgs3, seq3, D3 = 2, 2, 64, 32     # T = 128, tile = 64 -> 2 exact tiles
    kk = jax.random.split(k1, 3)
    t3, s3 = mk(kk[0], kk[1], (bsz3, n_imgs3, seq3, D3))
    m3 = (jax.random.uniform(kk[2], (bsz3, n_imgs3, seq3 - 1)) > 0.5).astype(
        jnp.float32
    )
    c3 = jnp.zeros((D3,), jnp.float32)
    run_case("divisor_tiles_f32", t3, s3, m3, c3, step=3, max_tile=64)

    print("KERNEL_OK")
</pallas_src>

<mosaic_0001>
module attributes {stable_mosaic.version = 11 : i64} {
  func.func @_ibot_kernel(%arg0: i32, %arg1: i32, %arg2: memref<1xf32, #tpu.memory_space<smem>>, %arg3: memref<1x18x32xf32, #tpu.memory_space<vmem>>, %arg4: memref<1x18x32xf32, #tpu.memory_space<vmem>>, %arg5: memref<1x1x1x18xf32, #tpu.memory_space<vmem>>, %arg6: memref<1x32xf32, #tpu.memory_space<vmem>>, %arg7: memref<1x1x18x1xf32, #tpu.memory_space<vmem>>, %arg8: memref<1x1x1x32xf32, #tpu.memory_space<vmem>>) attributes {dimension_semantics = [#tpu.dimension_semantics<parallel>, #tpu.dimension_semantics<parallel>], iteration_bounds = array<i64: 2, 1>, scalar_prefetch = 1 : i64, scratch_operands = 0 : i64, tpu.core_type = #tpu.core_type<tc>, window_params = [{transform_indices = @transform_0, window_bounds = array<i64: 1, 18, 32>}, {transform_indices = @transform_1, window_bounds = array<i64: 1, 18, 32>}, {transform_indices = @transform_2, window_bounds = array<i64: 1, 1, 1, 18>}, {pipeline_mode = #tpu.pipeline_mode<synchronous>, transform_indices = @transform_3, window_bounds = array<i64: 1, 32>}, {transform_indices = @transform_4, window_bounds = array<i64: 1, 1, 18, 1>}, {transform_indices = @transform_5, window_bounds = array<i64: 1, 1, 1, 32>}]} {
    %c0 = arith.constant 0 : index
    %0 = memref.load %arg2[%c0] : memref<1xf32, #tpu.memory_space<smem>>
    %c0_0 = arith.constant 0 : index
    %c0_1 = arith.constant 0 : index
    %c0_2 = arith.constant 0 : index
    %1 = vector.load %arg3[%c0_0, %c0_1, %c0_2] : memref<1x18x32xf32, #tpu.memory_space<vmem>>, vector<1x18x32xf32>
    %2 = vector.shape_cast %1 : vector<1x18x32xf32> to vector<18x32xf32>
    %c0_3 = arith.constant 0 : index
    %c0_4 = arith.constant 0 : index
    %c0_5 = arith.constant 0 : index
    %c0_6 = arith.constant 0 : index
    %3 = vector.load %arg5[%c0_3, %c0_4, %c0_5, %c0_6] : memref<1x1x1x18xf32, #tpu.memory_space<vmem>>, vector<1x1x1x18xf32>
    %4 = vector.shape_cast %3 : vector<1x1x1x18xf32> to vector<1x18xf32>
    %c0_7 = arith.constant 0 : index
    %c0_8 = arith.constant 0 : index
    %5 = vector.load %arg6[%c0_7, %c0_8] : memref<1x32xf32, #tpu.memory_space<vmem>>, vector<1x32xf32>
    %6 = vector.broadcast %5 : vector<1x32xf32> to vector<18x32xf32>
    %7 = arith.subf %2, %6 : vector<18x32xf32>
    %8 = vector.broadcast %0 : f32 to vector<18x32xf32>
    %9 = arith.mulf %7, %8 : vector<18x32xf32>
    %cst = arith.constant dense<0xFF800000> : vector<18xf32>
    %10 = vector.multi_reduction <maximumf>, %9, %cst [1] : vector<18x32xf32> to vector<18xf32>
    %11 = vector.shape_cast %10 : vector<18xf32> to vector<18x1xf32>
    %12 = vector.broadcast %11 : vector<18x1xf32> to vector<18x32xf32>
    %13 = arith.subf %9, %12 : vector<18x32xf32>
    %14 = math.exp %13 : vector<18x32xf32>
    %cst_9 = arith.constant dense<0.000000e+00> : vector<18xf32>
    %15 = vector.multi_reduction <add>, %14, %cst_9 [1] : vector<18x32xf32> to vector<18xf32>
    %16 = vector.shape_cast %15 : vector<18xf32> to vector<18x1xf32>
    %c0_10 = arith.constant 0 : index
    %c0_11 = arith.constant 0 : index
    %c0_12 = arith.constant 0 : index
    %17 = vector.load %arg4[%c0_10, %c0_11, %c0_12] : memref<1x18x32xf32, #tpu.memory_space<vmem>>, vector<1x18x32xf32>
    %18 = vector.shape_cast %17 : vector<1x18x32xf32> to vector<18x32xf32>
    %19 = arith.mulf %14, %18 : vector<18x32xf32>
    %cst_13 = arith.constant dense<0.000000e+00> : vector<18xf32>
    %20 = vector.multi_reduction <add>, %19, %cst_13 [1] : vector<18x32xf32> to vector<18xf32>
    %21 = vector.shape_cast %20 : vector<18xf32> to vector<18x1xf32>
    %cst_14 = arith.constant 1.000000e+01 : f32
    %22 = vector.broadcast %cst_14 : f32 to vector<18x32xf32>
    %23 = arith.mulf %18, %22 : vector<18x32xf32>
    %cst_15 = arith.constant dense<0xFF800000> : vector<18xf32>
    %24 = vector.multi_reduction <maximumf>, %23, %cst_15 [1] : vector<18x32xf32> to vector<18xf32>
    %25 = vector.shape_cast %24 : vector<18xf32> to vector<18x1xf32>
    %26 = vector.broadcast %25 : vector<18x1xf32> to vector<18x32xf32>
    %27 = arith.subf %23, %26 : vector<18x32xf32>
    %28 = math.exp %27 : vector<18x32xf32>
    %cst_16 = arith.constant dense<0.000000e+00> : vector<18xf32>
    %29 = vector.multi_reduction <add>, %28, %cst_16 [1] : vector<18x32xf32> to vector<18xf32>
    %30 = vector.shape_cast %29 : vector<18xf32> to vector<18x1xf32>
    %31 = math.log %30 : vector<18x1xf32>
    %32 = arith.addf %25, %31 : vector<18x1xf32>
    %cst_17 = arith.constant 1.000000e+01 : f32
    %33 = vector.broadcast %cst_17 : f32 to vector<18x1xf32>
    %34 = arith.mulf %33, %21 : vector<18x1xf32>
    %35 = tpu.reciprocal %16 : vector<18x1xf32> -> vector<18x1xf32>
    %36 = arith.mulf %34, %35 : vector<18x1xf32>
    %37 = arith.subf %32, %36 : vector<18x1xf32>
    %38 = vector.shape_cast %37 : vector<18x1xf32> to vector<1x1x18x1xf32>
    %c0_18 = arith.constant 0 : index
    %c0_19 = arith.constant 0 : index
    %c0_20 = arith.constant 0 : index
    %c0_21 = arith.constant 0 : index
    %39 = vector.load %arg7[%c0_18, %c0_19, %c0_20, %c0_21] : memref<1x1x18x1xf32, #tpu.memory_space<vmem>>, vector<1x1x18x1xf32>
    tpu.vector_store %arg7[%c0_18, %c0_19, %c0_20, %c0_21], %38 {strides = array<i32>} : memref<1x1x18x1xf32, #tpu.memory_space<vmem>>, vector<1x1x18x1xf32>,
    %cst_22 = arith.constant dense<0.000000e+00> : vector<1x32xf32>
    %40 = tpu.matmul %4, %2, %cst_22 {dimension_numbers = #tpu.dot_dimension_numbers<[1], [0], [0], [1], [0, 0, 1, 1], [], []>, precision = #tpu.contract_precision<fp32>} : vector<1x18xf32>, vector<18x32xf32>, vector<1x32xf32> -> vector<1x32xf32>
    %41 = vector.shape_cast %40 : vector<1x32xf32> to vector<1x1x1x32xf32>
    %c0_23 = arith.constant 0 : index
    %c0_24 = arith.constant 0 : index
    %c0_25 = arith.constant 0 : index
    %c0_26 = arith.constant 0 : index
    %42 = vector.load %arg8[%c0_23, %c0_24, %c0_25, %c0_26] : memref<1x1x1x32xf32, #tpu.memory_space<vmem>>, vector<1x1x1x32xf32>
    tpu.vector_store %arg8[%c0_23, %c0_24, %c0_25, %c0_26], %41 {strides = array<i32>} : memref<1x1x1x32xf32, #tpu.memory_space<vmem>>, vector<1x1x1x32xf32>,
    return
  }
  func.func @transform_0(%arg0: i32, %arg1: i32, %arg2: memref<1xf32, #tpu.memory_space<smem>>) -> (i32, i32, i32) {
    %c0_i32 = arith.constant 0 : i32
    %c0_i32_0 = arith.constant 0 : i32
    return %arg0, %arg1, %c0_i32 : i32, i32, i32
  }
  func.func @transform_1(%arg0: i32, %arg1: i32, %arg2: memref<1xf32, #tpu.memory_space<smem>>) -> (i32, i32, i32) {
    %c0_i32 = arith.constant 0 : i32
    %c0_i32_0 = arith.constant 0 : i32
    return %arg0, %arg1, %c0_i32 : i32, i32, i32
  }
  func.func @transform_2(%arg0: i32, %arg1: i32, %arg2: memref<1xf32, #tpu.memory_space<smem>>) -> (i32, i32, i32, i32) {
    %c0_i32 = arith.constant 0 : i32
    %c0_i32_0 = arith.constant 0 : i32
    %c0_i32_1 = arith.constant 0 : i32
    return %arg0, %arg1, %c0_i32, %c0_i32_0 : i32, i32, i32, i32
  }
  func.func @transform_3(%arg0: i32, %arg1: i32, %arg2: memref<1xf32, #tpu.memory_space<smem>>) -> (i32, i32) {
    %c0_i32 = arith.constant 0 : i32
    %c0_i32_0 = arith.constant 0 : i32
    %c0_i32_1 = arith.constant 0 : i32
    return %c0_i32, %c0_i32_0 : i32, i32
  }
  func.func @transform_4(%arg0: i32, %arg1: i32, %arg2: memref<1xf32, #tpu.memory_space<smem>>) -> (i32, i32, i32, i32) {
    %c0_i32 = arith.constant 0 : i32
    %c0_i32_0 = arith.constant 0 : i32
    %c0_i32_1 = arith.constant 0 : i32
    return %arg0, %arg1, %c0_i32, %c0_i32_0 : i32, i32, i32, i32
  }
  func.func @transform_5(%arg0: i32, %arg1: i32, %arg2: memref<1xf32, #tpu.memory_space<smem>>) -> (i32, i32, i32, i32) {
    %c0_i32 = arith.constant 0 : i32
    %c0_i32_0 = arith.constant 0 : i32
    %c0_i32_1 = arith.constant 0 : i32
    return %arg0, %arg1, %c0_i32, %c0_i32_0 : i32, i32, i32, i32
  }
}

</mosaic_0001>

<llo_original>
// kernel: tpu_custom_call.1
$region0: #{tpu_custom_call.1}
  #allocation0 [shape = 'u32[]', space=smem, size = 0x4, offset = 0x4, fixed_abs, tag = 'smem constant byte address 0x4 - core index']
  #allocation1 [shape = 'u32[72,128]{1,0:T(1,128)}', space=vmem, size = 0x9000, scoped, tag = 'internal scratch']
  #allocation2 [shape = 's32[1]{0}', space=sflag, size = 0x4, scoped, tag = 'scoped memory for tpu_custom_call.1']
  #allocation3 [shape = 'f32[1]{0:T(128)S(6)}', space=smem, size = 0x200, scoped, tag = 'prefetched SMEM operand 0']
  %s0 = inlined_call_operand.<no memory space> [shape: f32[1], index: 0, kind: input, shape index: {}]
  %s1 = inlined_call_operand.vmem [shape: f32[2,18,32], index: 1, kind: input, shape index: {}]
  %s2 = inlined_call_operand.vmem [shape: f32[2,18,32], index: 2, kind: input, shape index: {}]
  %s3 = inlined_call_operand.vmem [shape: f32[2,1,1,18], index: 3, kind: input, shape index: {}]
  %s4 = inlined_call_operand.vmem [shape: f32[1,32], index: 4, kind: input, shape index: {}]
  %s5 = inlined_call_operand.vmem [shape: f32[2,1,18,1], index: 5, kind: output, shape index: {0}]
  %s6 = inlined_call_operand.hbm [shape: f32[2,1,1,32], index: 6, kind: output, shape index: {1}]
  %7 = xla_tuple %s5, %s6
  %s8 = sld [smem:[#allocation0]]
  $region57: #{tpu_custom_call.1} parent=0
    _
  %s10 = ssub.s32 1, %s8
  %s11 = scalar_select 0, %s10, %s8
  %12 = sst [smem:[#allocation3]] %s0
  $region1: #{tpu_custom_call.1} parent=0
    #allocation4 [shape = 'u8[1024]{0}', space=vmem, size = 0x400, scoped, tag = 'output window, operand 1']
    #allocation5 [shape = 's32[2]{0}', space=sflag, size = 0x8, scoped, tag = 'scoped memory for tpu_custom_call.1']
    %13 = vsyncpa [#allocation5], 0
    %s14 = scalar_lea.sflag [#allocation5], 1
    %15 = vsyncpa %s14, 0
    loop: start=0, step=1, limit=4
    $region2: #{tpu_custom_call.1} parent=1 // loop_pre_header
      _
    $region3: #{tpu_custom_call.1} parent=1 // loop_header
      %s17 = sphi 0, %s21
      %p18 = scmp.ge.s32.totalorder %s17, 4
      %s24 = sphi 0, %s36
      %s25 = sphi 0, %s32
      %s26 = sphi 0, %s24
      %s27 = sphi 0, %s25
      %s28 = sphi 0, %s26
      %s29 = sphi 0, %s27
      %s41 = sphi 0, %s43
      %s44 = sphi 0, %s41
      %s45 = sphi 0, %s44
      %s61 = sphi 0, %s45
      %s69 = sphi 0, %s71
      %s72 = sphi 0, %s69
      %s73 = sphi 0, %s72
      %s89 = sphi 0, %s73
      %s97 = sphi 0, %s99
      %s100 = sphi 0, %s97
      %s101 = sphi 0, %s100
      %s117 = sphi 0, %s101
      %s121 = sphi 0, %s121
      %s123 = sphi 0, %s121
      %s124 = sphi 0, %s123
      %s138 = sphi 0, %s124
      %s146 = sphi 0, %s148
      %s149 = sphi 0, %s146
      %s150 = sphi 0, %s149
      %s166 = sphi 0, %s150
      %s174 = sphi 0, %s176
      %s177 = sphi 0, %s174
      %s178 = sphi 0, %s177
      %s194 = sphi 0, %s178
    $region4: #{tpu_custom_call.1} parent=1 // loop_header_branch
      %20 = sbr.rel (%p18) target = $region8
    $region5: #{tpu_custom_call.1} parent=1 // loop_body
      %s22 = ssub.s32 %s17, 1
      %s23 = ssub.s32 %s17, 2
      %s30 = sadd.s32 1, %s25
      %p31 = scmp.ge.s32.totalorder %s30, 1
      %s32 = scalar_select %p31, 0, %s30
      %s33 = sadd.s32 1, %s24
      %s34 = scalar_select %p31, %s33, %s24
      %p35 = scmp.ge.s32.totalorder %s34, 2
      %s36 = scalar_select %p35, 0, %s34
      %s37 = ssub.s32 %s24, %s36
      %s38 = ssub.s32 %s25, %s32
      %s39 = sor.u32 %s37, %s38
      %p40 = scmp.eq.s32.totalorder %s39, 0
      %s42 = sadd.s32 %s41, 1
      %s43 = scalar_select %p40, %s41, %s42
      %p46 = pneg %p40
      %p47 = scmp.eq.s32.totalorder %s17, 1
      %p48 = por %p46, %p47
      %p49 = scmp.ne.s32.totalorder %s41, %s44
      %p50 = scmp.eq.s32.totalorder %s17, 0
      %p51 = por %p49, %p50
      %p52 = scmp.ne.s32.totalorder %s41, %s44
      %p53 = scmp.eq.s32.totalorder %s22, 1
      %p54 = por %p52, %p53
      %p55 = scmp.ne.s32.totalorder %s44, %s45
      %p56 = scmp.eq.s32.totalorder %s22, 0
      %p57 = por %p55, %p56
      %p58 = scmp.ne.s32.totalorder %s44, %s45
      %p59 = scmp.eq.s32.totalorder %s23, 1
      %p60 = por %p58, %p59
      %p62 = scmp.ne.s32.totalorder %s45, %s61
      %p63 = scmp.eq.s32.totalorder %s23, 0
      %p64 = por %p62, %p63
      %s65 = ssub.s32 %s24, %s36
      %s66 = ssub.s32 %s25, %s32
      %s67 = sor.u32 %s65, %s66
      %p68 = scmp.eq.s32.totalorder %s67, 0
      %s70 = sadd.s32 %s69, 1
      %s71 = scalar_select %p68, %s69, %s70
      %p74 = pneg %p68
      %p75 = scmp.eq.s32.totalorder %s17, 1
      %p76 = por %p74, %p75
      %p77 = scmp.ne.s32.totalorder %s69, %s72
      %p78 = scmp.eq.s32.totalorder %s17, 0
      %p79 = por %p77, %p78
      %p80 = scmp.ne.s32.totalorder %s69, %s72
      %p81 = scmp.eq.s32.totalorder %s22, 1
      %p82 = por %p80, %p81
      %p83 = scmp.ne.s32.totalorder %s72, %s73
      %p84 = scmp.eq.s32.totalorder %s22, 0
      %p85 = por %p83, %p84
      %p86 = scmp.ne.s32.totalorder %s72, %s73
      %p87 = scmp.eq.s32.totalorder %s23, 1
      %p88 = por %p86, %p87
      %p90 = scmp.ne.s32.totalorder %s73, %s89
      %p91 = scmp.eq.s32.totalorder %s23, 0
      %p92 = por %p90, %p91
      %s93 = ssub.s32 %s24, %s36
      %s94 = ssub.s32 %s25, %s32
      %s95 = sor.u32 %s93, %s94
      %p96 = scmp.eq.s32.totalorder %s95, 0
      %s98 = sadd.s32 %s97, 1
      %s99 = scalar_select %p96, %s97, %s98
      %p102 = pneg %p96
      %p103 = scmp.eq.s32.totalorder %s17, 1
      %p104 = por %p102, %p103
      %p105 = scmp.ne.s32.totalorder %s97, %s100
      %p106 = scmp.eq.s32.totalorder %s17, 0
      %p107 = por %p105, %p106
      %p108 = scmp.ne.s32.totalorder %s97, %s100
      %p109 = scmp.eq.s32.totalorder %s22, 1
      %p110 = por %p108, %p109
      %p111 = scmp.ne.s32.totalorder %s100, %s101
      %p112 = scmp.eq.s32.totalorder %s22, 0
      %p113 = por %p111, %p112
      %p114 = scmp.ne.s32.totalorder %s100, %s101
      %p115 = scmp.eq.s32.totalorder %s23, 1
      %p116 = por %p114, %p115
      %p118 = scmp.ne.s32.totalorder %s101, %s117
      %p119 = scmp.eq.s32.totalorder %s23, 0
      %p120 = por %p118, %p119
      %s122 = sadd.s32 %s121, 1
      %p125 = scmp.eq.s32.totalorder %s17, 1
      %p126 = scmp.ne.s32.totalorder %s121, %s123
      %p127 = scmp.eq.s32.totalorder %s17, 0
      %p128 = por %p126, %p127
      %p129 = scmp.ne.s32.totalorder %s121, %s123
      %p130 = scmp.eq.s32.totalorder %s22, 1
      %p131 = por %p129, %p130
      %p132 = scmp.ne.s32.totalorder %s123, %s124
      %p133 = scmp.eq.s32.totalorder %s22, 0
      %p134 = por %p132, %p133
      %p135 = scmp.ne.s32.totalorder %s123, %s124
      %p136 = scmp.eq.s32.totalorder %s23, 1
      %p137 = por %p135, %p136
      %p139 = scmp.ne.s32.totalorder %s124, %s138
      %p140 = scmp.eq.s32.totalorder %s23, 0
      %p141 = por %p139, %p140
      %s142 = ssub.s32 %s24, %s36
      %s143 = ssub.s32 %s25, %s32
      %s144 = sor.u32 %s142, %s143
      %p145 = scmp.eq.s32.totalorder %s144, 0
      %s147 = sadd.s32 %s146, 1
      %s148 = scalar_select %p145, %s146, %s147
      %p151 = pneg %p145
      %p152 = scmp.eq.s32.totalorder %s17, 1
      %p153 = por %p151, %p152
      %p154 = scmp.ne.s32.totalorder %s146, %s149
      %p155 = scmp.eq.s32.totalorder %s17, 0
      %p156 = por %p154, %p155
      %p157 = scmp.ne.s32.totalorder %s146, %s149
      %p158 = scmp.eq.s32.totalorder %s22, 1
      %p159 = por %p157, %p158
      %p160 = scmp.ne.s32.totalorder %s149, %s150
      %p161 = scmp.eq.s32.totalorder %s22, 0
      %p162 = por %p160, %p161
      %p163 = scmp.ne.s32.totalorder %s149, %s150
      %p164 = scmp.eq.s32.totalorder %s23, 1
      %p165 = por %p163, %p164
      %p167 = scmp.ne.s32.totalorder %s150, %s166
      %p168 = scmp.eq.s32.totalorder %s23, 0
      %p169 = por %p167, %p168
      %s170 = ssub.s32 %s24, %s36
      %s171 = ssub.s32 %s25, %s32
      %s172 = sor.u32 %s170, %s171
      %p173 = scmp.eq.s32.totalorder %s172, 0
      %s175 = sadd.s32 %s174, 1
      %s176 = scalar_select %p173, %s174, %s175
      %p179 = pneg %p173
      %p180 = scmp.eq.s32.totalorder %s17, 1
      %p181 = por %p179, %p180
      %p182 = scmp.ne.s32.totalorder %s174, %s177
      %p183 = scmp.eq.s32.totalorder %s17, 0
      %p184 = por %p182, %p183
      %p185 = scmp.ne.s32.totalorder %s174, %s177
      %p186 = scmp.eq.s32.totalorder %s22, 1
      %p187 = por %p185, %p186
      %p188 = scmp.ne.s32.totalorder %s177, %s178
      %p189 = scmp.eq.s32.totalorder %s22, 0
      %p190 = por %p188, %p189
      %p191 = scmp.ne.s32.totalorder %s177, %s178
      %p192 = scmp.eq.s32.totalorder %s23, 1
      %p193 = por %p191, %p192
      %p195 = scmp.ne.s32.totalorder %s178, %s194
      %p196 = scmp.eq.s32.totalorder %s23, 0
      %p197 = por %p195, %p196
      %p198 = scmp.le.s32.totalorder 1, %s17
      %p199 = scmp.lt.s32.totalorder %s17, 3
      %p200 = pnand %p198, %p199
      %p201 = pneg %p200
      // Predicated region
      $region9: #{tpu_custom_call.1} parent=5 // pred_check
        _
      $region10: #{tpu_custom_call.1} parent=5 // pred_check_branch
        %203 = sbr.rel (%p200) target = $region12
      $region11: #{tpu_custom_call.1} parent=5 // pred_region
        %s204 = ssub.s32 %s17, 1
        // Predicated region
        $region13: #{tpu_custom_call.1} parent=11 // pred_check
          %p205 = pneg %p134
        $region14: #{tpu_custom_call.1} parent=11 // pred_check_branch
          %207 = sbr.rel (%p205) target = $region16
        $region15: #{tpu_custom_call.1} parent=11 // pred_region
          _
        $region16: #{tpu_custom_call.1} parent=11 // pred_fallthru
          _
      $region12: #{tpu_custom_call.1} parent=5 // pred_fallthru
        _
      %p208 = scmp.lt.s32.totalorder %s17, 2
      // Predicated region
      $region17: #{tpu_custom_call.1} parent=5 // pred_check
        %p209 = pneg %p208
      $region18: #{tpu_custom_call.1} parent=5 // pred_check_branch
        %211 = sbr.rel (%p209) target = $region20
      $region19: #{tpu_custom_call.1} parent=5 // pred_region
        // Predicated region
        $region21: #{tpu_custom_call.1} parent=19 // pred_check
          %p212 = pneg %p51
        $region22: #{tpu_custom_call.1} parent=19 // pred_check_branch
          %214 = sbr.rel (%p212) target = $region24
        $region23: #{tpu_custom_call.1} parent=19 // pred_region
          %s215 = smul.u32 3, %s25
          %p216 = scmp.lt.s32.totalorder %s24, 1
          %s217 = scalar_select %p216, %s24, 1
          %p218 = scmp.lt.s32.totalorder %s215, 2
          %s219 = scalar_select %p218, %s215, 2
          %s220 = smul.addr %s217, 3
          %s221 = sadd.s32 %s219, %s220
          %s222 = smul.addr %s221, 8
          %s223 = scalar_lea.vmem %s1, %s222
          %s224 = smul.u32 3, %s25
        $region24: #{tpu_custom_call.1} parent=19 // pred_fallthru
          _
        // Predicated region
        $region25: #{tpu_custom_call.1} parent=19 // pred_check
          %p225 = pneg %p79
        $region26: #{tpu_custom_call.1} parent=19 // pred_check_branch
          %227 = sbr.rel (%p225) target = $region28
        $region27: #{tpu_custom_call.1} parent=19 // pred_region
          %s228 = smul.u32 3, %s25
          %p229 = scmp.lt.s32.totalorder %s24, 1
          %s230 = scalar_select %p229, %s24, 1
          %p231 = scmp.lt.s32.totalorder %s228, 2
          %s232 = scalar_select %p231, %s228, 2
          %s233 = smul.addr %s230, 3
          %s234 = sadd.s32 %s232, %s233
          %s235 = smul.addr %s234, 8
          %s236 = scalar_lea.vmem %s2, %s235
          %s237 = smul.u32 3, %s25
        $region28: #{tpu_custom_call.1} parent=19 // pred_fallthru
          _
        // Predicated region
        $region29: #{tpu_custom_call.1} parent=19 // pred_check
          %p238 = pneg %p107
        $region30: #{tpu_custom_call.1} parent=19 // pred_check_branch
          %240 = sbr.rel (%p238) target = $region32
        $region31: #{tpu_custom_call.1} parent=19 // pred_region
          %p241 = scmp.lt.s32.totalorder %s24, 1
          %s242 = scalar_select %p241, %s24, 1
          %p243 = scmp.lt.s32.totalorder %s25, 0
          %s244 = scalar_select %p243, %s25, 0
          %s245 = sadd.s32 %s244, %s242
          %s246 = scalar_lea.vmem %s3, %s245
        $region32: #{tpu_custom_call.1} parent=19 // pred_fallthru
          _
      $region20: #{tpu_custom_call.1} parent=5 // pred_fallthru
        _
      %p247 = scmp.le.s32.totalorder 1, %s17
      %p248 = scmp.lt.s32.totalorder %s17, 3
      %p249 = pnand %p247, %p248
      %p250 = pneg %p249
      // Predicated region
      $region33: #{tpu_custom_call.1} parent=5 // pred_check
        _
      $region34: #{tpu_custom_call.1} parent=5 // pred_check_branch
        %252 = sbr.rel (%p249) target = $region36
      $region35: #{tpu_custom_call.1} parent=5 // pred_region
        %s253 = ssub.s32 %s17, 1
        %s254 = smul.u32 3, %s27
        %p255 = scmp.lt.s32.totalorder %s26, 1
        %s256 = scalar_select %p255, %s26, 1
        %p257 = scmp.lt.s32.totalorder %s254, 2
        %s258 = scalar_select %p257, %s254, 2
        %s259 = smul.addr %s256, 3
        %s260 = sadd.s32 %s258, %s259
        %s261 = smul.addr %s260, 8
        %s262 = scalar_lea.vmem %s1, %s261
        %p263 = pneg %p57
        %p264 = pneg %p54
        %s265 = smul.u32 3, %s27
        %p266 = scmp.lt.s32.totalorder %s26, 1
        %s267 = scalar_select %p266, %s26, 1
        %p268 = scmp.lt.s32.totalorder %s265, 2
        %s269 = scalar_select %p268, %s265, 2
        %s270 = smul.addr %s267, 3
        %s271 = sadd.s32 %s269, %s270
        %s272 = smul.addr %s271, 8
        %s273 = scalar_lea.vmem %s2, %s272
        %p274 = pneg %p85
        %p275 = pneg %p82
        %p276 = scmp.lt.s32.totalorder %s26, 1
        %s277 = scalar_select %p276, %s26, 1
        %p278 = scmp.lt.s32.totalorder %s27, 0
        %s279 = scalar_select %p278, %s27, 0
        %s280 = sadd.s32 %s279, %s277
        %s281 = scalar_lea.vmem %s3, %s280
        %p282 = pneg %p113
        %p283 = pneg %p110
        %p284 = pneg %p134
        %p285 = pneg %p131
        %p286 = pneg %p162
        %p287 = pneg %p159
        %p288 = scmp.lt.s32.totalorder %s26, 1
        %s289 = scalar_select %p288, %s26, 1
        %p290 = scmp.lt.s32.totalorder %s27, 0
        %s291 = scalar_select %p290, %s27, 0
        %s292 = smul.addr %s291, 3
        %s293 = smul.addr %s289, 3
        %s294 = sadd.s32 %s292, %s293
        %s295 = smul.addr %s294, 8
        %s296 = scalar_lea.vmem %s5, %s295
        %p297 = pneg %p190
        %p298 = pneg %p187
        %s299 = sand.u32 %s177, 1
        %s300 = scalar_lea.sflag [#allocation5], %s299
        %s301 = sand.u32 %s177, 1
        %s302 = scalar_lea.vmem [#allocation4], %s301
        %s303 = smul.u32 3, %s27
        %p304 = scmp.lt.s32.totalorder %s26, 1
        %s305 = scalar_select %p304, %s26, 1
        %p306 = scmp.lt.s32.totalorder %s303, 2
        %s307 = scalar_select %p306, %s303, 2
        %s308 = smul.addr %s305, 3
        %s309 = sadd.s32 %s307, %s308
        %s310 = smul.addr %s309, 8
        %s311 = scalar_lea.vmem %s1, %s310
        %s312 = smul.u32 3, %s27
        %s313 = smul.u32 3, %s27
        %p314 = scmp.lt.s32.totalorder %s26, 1
        %s315 = scalar_select %p314, %s26, 1
        %p316 = scmp.lt.s32.totalorder %s313, 2
        %s317 = scalar_select %p316, %s313, 2
        %s318 = smul.addr %s315, 3
        %s319 = sadd.s32 %s317, %s318
        %s320 = smul.addr %s319, 8
        %s321 = scalar_lea.vmem %s2, %s320
        %s322 = smul.u32 3, %s27
        %p323 = scmp.lt.s32.totalorder %s26, 1
        %s324 = scalar_select %p323, %s26, 1
        %p325 = scmp.lt.s32.totalorder %s27, 0
        %s326 = scalar_select %p325, %s27, 0
        %s327 = sadd.s32 %s326, %s324
        %s328 = scalar_lea.vmem %s3, %s327
        %p329 = scmp.lt.s32.totalorder %s26, 1
        %s330 = scalar_select %p329, %s26, 1
        %p331 = scmp.lt.s32.totalorder %s27, 0
        %s332 = scalar_select %p331, %s27, 0
        %s333 = smul.addr %s332, 3
        %s334 = smul.addr %s330, 3
        %s335 = sadd.s32 %s333, %s334
        %s336 = smul.addr %s335, 8
        %s337 = scalar_lea.vmem %s5, %s336
        %s338 = sld [smem:[#allocation3]]
        %v339 = vld [vmem:[%s311] sm:$0xff]
        %v340 = vld [vmem:[%s311 + $0x8] sm:$0xff]
        %v341 = vld [vmem:[%s311 + $0x10] sm:$0x3]
        %v342 = vld [vmem:[%s328] sm:$0x1]
        %v343 = vld [vmem:[%s4] sm:$0x1]
        %v345 = vperm.slane %v343, 0
        %v347 = vsub.f32 %v339, %v345
        %v348 = vsub.f32 %v340, %v345
        %v349 = vsub.f32 %v341, %v345
        %v350 = vstv %s338
        %v351 = vmul.f32 %v347, %v350
        %v352 = vmul.f32 %v348, %v350
        %v353 = vmul.f32 %v349, %v350
        %vm354 = vcmask 261120
        %v355 = vsel %vm354, %v351, -inf
        %356 = vmax.xlane.f32.xlu0 %v355
        %v357 = vpop.xlane.xlu0 %356
        %v358 = vsel %vm354, %v352, -inf
        %359 = vmax.xlane.f32.xlu0 %v358
        %v360 = vpop.xlane.xlu0 %359
        %vm361 = vcmask 254976
        %v362 = vsel %vm361, %v353, -inf
        %363 = vmax.xlane.f32.xlu0 %v362
        %v364 = vpop.xlane.xlu0 %363
        %v365 = vsub.f32 %v351, %v357
        %v366 = vsub.f32 %v352, %v360
        %v367 = vsub.f32 %v353, %v364
        %v368 = vmul.f32 %v365, 1.442695
        %v369 = vpow.pop %v368
        %v370 = vmul.f32 %v366, 1.442695
        %v371 = vpow.pop %v370
        %v372 = vmul.f32 %v367, 1.442695
        %v373 = vpow.pop %v372
        %v374 = vsel %vm354, %v369, 0.0
        %375 = vadd.xlane.f32.xlu0 %v374
        %v376 = vpop.xlane.xlu0 %375
        %v377 = vsel %vm354, %v371, 0.0
        %378 = vadd.xlane.f32.xlu0 %v377
        %v379 = vpop.xlane.xlu0 %378
        %v380 = vsel %vm361, %v373, 0.0
        %381 = vadd.xlane.f32.xlu0 %v380
        %v382 = vpop.xlane.xlu0 %381
        %v383 = vld [vmem:[%s321] sm:$0xff]
        %v384 = vld [vmem:[%s321 + $0x8] sm:$0xff]
        %v385 = vld [vmem:[%s321 + $0x10] sm:$0x3]
        %v386 = vmul.f32 %v369, %v383
        %v387 = vmul.f32 %v371, %v384
        %v388 = vmul.f32 %v373, %v385
        %v389 = vsel %vm354, %v386, 0.0
        %390 = vadd.xlane.f32.xlu0 %v389
        %v391 = vpop.xlane.xlu0 %390
        %v392 = vsel %vm354, %v387, 0.0
        %393 = vadd.xlane.f32.xlu0 %v392
        %v394 = vpop.xlane.xlu0 %393
        %v395 = vsel %vm361, %v388, 0.0
        %396 = vadd.xlane.f32.xlu0 %v395
        %v397 = vpop.xlane.xlu0 %396
        %v398 = vmul.f32 %v383, 10.0
        %v399 = vmul.f32 %v384, 10.0
        %v400 = vmul.f32 %v385, 10.0
        %v401 = vsel %vm354, %v398, -inf
        %402 = vmax.xlane.f32.xlu0 %v401
        %v403 = vpop.xlane.xlu0 %402
        %v404 = vsel %vm354, %v399, -inf
        %405 = vmax.xlane.f32.xlu0 %v404
        %v406 = vpop.xlane.xlu0 %405
        %v407 = vsel %vm361, %v400, -inf
        %408 = vmax.xlane.f32.xlu0 %v407
        %v409 = vpop.xlane.xlu0 %408
        %v410 = vsub.f32 %v398, %v403
        %v411 = vsub.f32 %v399, %v406
        %v412 = vsub.f32 %v400, %v409
        %v413 = vmul.f32 %v410, 1.442695
        %v414 = vpow.pop %v413
        %v415 = vmul.f32 %v411, 1.442695
        %v416 = vpow.pop %v415
        %v417 = vmul.f32 %v412, 1.442695
        %v418 = vpow.pop %v417
        %v419 = vsel %vm354, %v414, 0.0
        %420 = vadd.xlane.f32.xlu0 %v419
        %v421 = vpop.xlane.xlu0 %420
        %v422 = vsel %vm354, %v416, 0.0
        %423 = vadd.xlane.f32.xlu0 %v422
        %v424 = vpop.xlane.xlu0 %423
        %v425 = vsel %vm361, %v418, 0.0
        %426 = vadd.xlane.f32.xlu0 %v425
        %v427 = vpop.xlane.xlu0 %426
        %v428 = vlog2.pop %v421
        %v429 = vmul.f32 %v428, 0.6931472
        %v430 = vlog2.pop %v424
        %v431 = vmul.f32 %v430, 0.6931472
        %v432 = vlog2.pop %v427
        %v433 = vmul.f32 %v432, 0.6931472
        %v434 = vadd.f32 %v403, %v429
        %v435 = vadd.f32 %v406, %v431
        %v436 = vadd.f32 %v409, %v433
        %v437 = vmul.f32 %v391, 10.0
        %v438 = vmul.f32 %v394, 10.0
        %v439 = vmul.f32 %v397, 10.0
        %v440 = vrcp.pop %v376
        %v441 = vmul.f32 %v376, %v440
        %v442 = vsub.f32 1.0, %v441
        %v443 = vmul.f32 %v440, %v442
        %v444 = vadd.f32 %v440, %v443
        %vm445 = vweird.f32 %v376
        %vm446 = vweird.f32 %v440
        %vm447 = vmor %vm445, %vm446
        %v448 = vsel %vm447, %v440, %v444
        %v449 = vand.u32 2147483647, %v376
        %vm450 = vcmp.eq.f32.partialorder %v449, 8.507059e+37
        %v451 = vand.u32 %v376, 2147483648
        %v452 = vor.u32 1.1754944e-38, %v451
        %v453 = vsel %vm450, %v452, %v448
        %v454 = vrcp.pop %v379
        %v455 = vmul.f32 %v379, %v454
        %v456 = vsub.f32 1.0, %v455
        %v457 = vmul.f32 %v454, %v456
        %v458 = vadd.f32 %v454, %v457
        %vm459 = vweird.f32 %v379
        %vm460 = vweird.f32 %v454
        %vm461 = vmor %vm459, %vm460
        %v462 = vsel %vm461, %v454, %v458
        %v463 = vand.u32 2147483647, %v379
        %vm464 = vcmp.eq.f32.partialorder %v463, 8.507059e+37
        %v465 = vand.u32 %v379, 2147483648
        %v466 = vor.u32 1.1754944e-38, %v465
        %v467 = vsel %vm464, %v466, %v462
        %v468 = vrcp.pop %v382
        %v469 = vmul.f32 %v382, %v468
        %v470 = vsub.f32 1.0, %v469
        %v471 = vmul.f32 %v468, %v470
        %v472 = vadd.f32 %v468, %v471
        %vm473 = vweird.f32 %v382
        %vm474 = vweird.f32 %v468
        %vm475 = vmor %vm473, %vm474
        %v476 = vsel %vm475, %v468, %v472
        %v477 = vand.u32 2147483647, %v382
        %vm478 = vcmp.eq.f32.partialorder %v477, 8.507059e+37
        %v479 = vand.u32 %v382, 2147483648
        %v480 = vor.u32 1.1754944e-38, %v479
        %v481 = vsel %vm478, %v480, %v476
        %v482 = vmul.f32 %v437, %v453
        %v483 = vmul.f32 %v438, %v467
        %v484 = vmul.f32 %v439, %v481
        %v485 = vsub.f32 %v434, %v482
        %v486 = vsub.f32 %v435, %v483
        %v487 = vsub.f32 %v436, %v484
        %vm488 = vcmask 7168
        %489 = vst.msk [vmem:[%s337] sm:$0xff] %vm488, %v485
        %490 = vst.msk [vmem:[%s337 + $0x8] sm:$0xff] %vm488, %v486
        %vm491 = vcmask 1024
        %492 = vst.msk [vmem:[%s337 + $0x10] sm:$0x3] %vm491, %v487
        %vm493 = vcmask 146432
        %v495 = vsel %vm493, %v342, 0
        %vm497 = vcmask 1041408
        %v499 = vsel %vm497, %v341, 0
        %501 = vmatpush.msra.mxu0 0.0
        %502 = vmatpush.msra.mxu0 0.0
        %503 = vmatpush.msra.mxu0 0.0
        %504 = vmatpush.msra.mxu0 0.0
        %505 = vmatpush.msra.mxu0 0.0
        %506 = vmatpush.msra.mxu0 0.0
        %507 = vmatpush.msra.mxu0 0.0
        %508 = vmatpush.msra.mxu0 0.0
        %509 = vmatpush.msra.mxu0 0.0
        %510 = vmatpush.msra.mxu0 0.0
        %511 = vmatpush.msra.mxu0 0.0
        %512 = vmatpush.msra.mxu0 0.0
        %513 = vmatpush.msra.mxu0 0.0
        %v514 = vand.u32 %v499, 4294901760
        %515 = vmatpush.msra.mxu0 %v514
        %v516 = vand.u32 %v340, 4294901760
        %517 = vmatpush.msra.mxu0 %v516
        %v518 = vand.u32 %v339, 4294901760
        %519 = vmatpush.msra.mxu0 %v518
        %v520 = vand.u32 %v495, 4294901760
        %v521 = vsub.f32 %v495, %v520
        %v522 = vand.u32 %v521, 4294901760
        %v523 = vsub.f32 %v521, %v522
        %v524 = vand.u32 %v523, 4294901760
        %525 = vmatmul.f32.gmra.mxu0 %v524
        %v526 = vpop.f32.mrf.mxu0
        %v527 = vadd.f32 0.0, %v526
        %528 = vdwg.mxu0
        %529 = vmatpush.msra.mxu0 0.0
        %530 = vmatpush.msra.mxu0 0.0
        %531 = vmatpush.msra.mxu0 0.0
        %532 = vmatpush.msra.mxu0 0.0
        %533 = vmatpush.msra.mxu0 0.0
        %534 = vmatpush.msra.mxu0 0.0
        %535 = vmatpush.msra.mxu0 0.0
        %536 = vmatpush.msra.mxu0 0.0
        %537 = vmatpush.msra.mxu0 0.0
        %538 = vmatpush.msra.mxu0 0.0
        %539 = vmatpush.msra.mxu0 0.0
        %540 = vmatpush.msra.mxu0 0.0
        %541 = vmatpush.msra.mxu0 0.0
        %v542 = vand.u32 %v499, 4294901760
        %v543 = vsub.f32 %v499, %v542
        %v544 = vand.u32 %v543, 4294901760
        %v545 = vsub.f32 %v543, %v544
        %v546 = vand.u32 %v545, 4294901760
        %547 = vmatpush.msra.mxu0 %v546
        %v548 = vand.u32 %v340, 4294901760
        %v549 = vsub.f32 %v340, %v548
        %v550 = vand.u32 %v549, 4294901760
        %v551 = vsub.f32 %v549, %v550
        %v552 = vand.u32 %v551, 4294901760
        %553 = vmatpush.msra.mxu0 %v552
        %v554 = vand.u32 %v339, 4294901760
        %v555 = vsub.f32 %v339, %v554
        %v556 = vand.u32 %v555, 4294901760
        %v557 = vsub.f32 %v555, %v556
        %v558 = vand.u32 %v557, 4294901760
        %559 = vmatpush.msra.mxu0 %v558
        %v560 = vand.u32 %v495, 4294901760
        %561 = vmatmul.f32.gmra.mxu0 %v560
        %v562 = vpop.f32.mrf.mxu0
        %v563 = vadd.f32 %v527, %v562
        %564 = vdwg.mxu0
        %565 = vmatpush.msra.mxu0 0.0
        %566 = vmatpush.msra.mxu0 0.0
        %567 = vmatpush.msra.mxu0 0.0
        %568 = vmatpush.msra.mxu0 0.0
        %569 = vmatpush.msra.mxu0 0.0
        %570 = vmatpush.msra.mxu0 0.0
        %571 = vmatpush.msra.mxu0 0.0
        %572 = vmatpush.msra.mxu0 0.0
        %573 = vmatpush.msra.mxu0 0.0
        %574 = vmatpush.msra.mxu0 0.0
        %575 = vmatpush.msra.mxu0 0.0
        %576 = vmatpush.msra.mxu0 0.0
        %577 = vmatpush.msra.mxu0 0.0
        %v578 = vand.u32 %v499, 4294901760
        %v579 = vsub.f32 %v499, %v578
        %580 = vmatpush.msra.mxu0 %v579
        %v581 = vand.u32 %v340, 4294901760
        %v582 = vsub.f32 %v340, %v581
        %583 = vmatpush.msra.mxu0 %v582
        %v584 = vand.u32 %v339, 4294901760
        %v585 = vsub.f32 %v339, %v584
        %586 = vmatpush.msra.mxu0 %v585
        %v587 = vand.u32 %v495, 4294901760
        %v588 = vsub.f32 %v495, %v587
        %589 = vmatmul.f32.gmra.mxu0 %v588
        %v590 = vpop.f32.mrf.mxu0
        %v591 = vadd.f32 %v563, %v590
        %592 = vdwg.mxu0
        %593 = vmatpush.msra.mxu0 0.0
        %594 = vmatpush.msra.mxu0 0.0
        %595 = vmatpush.msra.mxu0 0.0
        %596 = vmatpush.msra.mxu0 0.0
        %597 = vmatpush.msra.mxu0 0.0
        %598 = vmatpush.msra.mxu0 0.0
        %599 = vmatpush.msra.mxu0 0.0
        %600 = vmatpush.msra.mxu0 0.0
        %601 = vmatpush.msra.mxu0 0.0
        %602 = vmatpush.msra.mxu0 0.0
        %603 = vmatpush.msra.mxu0 0.0
        %604 = vmatpush.msra.mxu0 0.0
        %605 = vmatpush.msra.mxu0 0.0
        %v606 = vand.u32 %v499, 4294901760
        %607 = vmatpush.msra.mxu0 %v606
        %v608 = vand.u32 %v340, 4294901760
        %609 = vmatpush.msra.mxu0 %v608
        %v610 = vand.u32 %v339, 4294901760
        %611 = vmatpush.msra.mxu0 %v610
        %v612 = vand.u32 %v495, 4294901760
        %v613 = vsub.f32 %v495, %v612
        %v614 = vand.u32 %v613, 4294901760
        %615 = vmatmul.f32.gmra.mxu0 %v614
        %v616 = vpop.f32.mrf.mxu0
        %v617 = vadd.f32 %v591, %v616
        %618 = vdwg.mxu0
        %619 = vmatpush.msra.mxu0 0.0
        %620 = vmatpush.msra.mxu0 0.0
        %621 = vmatpush.msra.mxu0 0.0
        %622 = vmatpush.msra.mxu0 0.0
        %623 = vmatpush.msra.mxu0 0.0
        %624 = vmatpush.msra.mxu0 0.0
        %625 = vmatpush.msra.mxu0 0.0
        %626 = vmatpush.msra.mxu0 0.0
        %627 = vmatpush.msra.mxu0 0.0
        %628 = vmatpush.msra.mxu0 0.0
        %629 = vmatpush.msra.mxu0 0.0
        %630 = vmatpush.msra.mxu0 0.0
        %631 = vmatpush.msra.mxu0 0.0
        %v632 = vand.u32 %v499, 4294901760
        %v633 = vsub.f32 %v499, %v632
        %v634 = vand.u32 %v633, 4294901760
        %635 = vmatpush.msra.mxu0 %v634
        %v636 = vand.u32 %v340, 4294901760
        %v637 = vsub.f32 %v340, %v636
        %v638 = vand.u32 %v637, 4294901760
        %639 = vmatpush.msra.mxu0 %v638
        %v640 = vand.u32 %v339, 4294901760
        %v641 = vsub.f32 %v339, %v640
        %v642 = vand.u32 %v641, 4294901760
        %643 = vmatpush.msra.mxu0 %v642
        %v644 = vand.u32 %v495, 4294901760
        %645 = vmatmul.f32.gmra.mxu0 %v644
        %v646 = vpop.f32.mrf.mxu0
        %v647 = vadd.f32 %v617, %v646
        %648 = vdwg.mxu0
        %649 = vmatpush.msra.mxu0 0.0
        %650 = vmatpush.msra.mxu0 0.0
        %651 = vmatpush.msra.mxu0 0.0
        %652 = vmatpush.msra.mxu0 0.0
        %653 = vmatpush.msra.mxu0 0.0
        %654 = vmatpush.msra.mxu0 0.0
        %655 = vmatpush.msra.mxu0 0.0
        %656 = vmatpush.msra.mxu0 0.0
        %657 = vmatpush.msra.mxu0 0.0
        %658 = vmatpush.msra.mxu0 0.0
        %659 = vmatpush.msra.mxu0 0.0
        %660 = vmatpush.msra.mxu0 0.0
        %661 = vmatpush.msra.mxu0 0.0
        %v662 = vand.u32 %v499, 4294901760
        %663 = vmatpush.msra.mxu0 %v662
        %v664 = vand.u32 %v340, 4294901760
        %665 = vmatpush.msra.mxu0 %v664
        %v666 = vand.u32 %v339, 4294901760
        %667 = vmatpush.msra.mxu0 %v666
        %v668 = vand.u32 %v495, 4294901760
        %669 = vmatmul.f32.gmra.mxu0 %v668
        %v670 = vpop.f32.mrf.mxu0
        %v671 = vadd.f32 %v647, %v670
        %672 = vdwg.mxu0
        %vm673 = vcmask 253952
        %674 = vst.msk [vmem:[%s302] sm:$0x1] %vm673, %v671
        %p675 = scmp.lt.s32.totalorder %s26, 1
        %s676 = scalar_select %p675, %s26, 1
        %p677 = scmp.lt.s32.totalorder %s27, 0
        %s678 = scalar_select %p677, %s27, 0
        %s679 = smul.addr %s678, 3
        %s680 = smul.addr %s676, 3
        %s681 = sadd.s32 %s679, %s680
        %s682 = smul.addr %s681, 8
        %s683 = scalar_lea.vmem %s5, %s682
        %s684 = sand.u32 %s177, 1
        %s685 = scalar_lea.sflag [#allocation5], %s684
        %s686 = sand.u32 %s177, 1
        %s687 = scalar_lea.vmem [#allocation4], %s686
        // Predicated region
        $region37: #{tpu_custom_call.1} parent=35 // pred_check
          %p688 = pneg %p159
        $region38: #{tpu_custom_call.1} parent=35 // pred_check_branch
          %690 = sbr.rel (%p688) target = $region40
        $region39: #{tpu_custom_call.1} parent=35 // pred_region
          _
        $region40: #{tpu_custom_call.1} parent=35 // pred_fallthru
          _
        // Predicated region
        $region41: #{tpu_custom_call.1} parent=35 // pred_check
          %p691 = pneg %p187
        $region42: #{tpu_custom_call.1} parent=35 // pred_check_branch
          %693 = sbr.rel (%p691) target = $region44
        $region43: #{tpu_custom_call.1} parent=35 // pred_region
          %695 = vsyncadd %s685, 0
          %s696 = sadd.s32 %s27, %s26
          %s697 = scalar_lea.hbm %s6, %s696
          %s699 = sshll.u32 %s687, 4
          %s700 = int_to_ptr.vmem [resolvable:$true] %s699
          %s701 = sshll.u32 %s697, 4
          %s702 = int_to_ptr.hbm [resolvable:$true] %s701
          %704 = dma.vmem_to_hbm [thread:$0]  %s700, 16, %s702, %s685
        $region44: #{tpu_custom_call.1} parent=35 // pred_fallthru
          _
      $region36: #{tpu_custom_call.1} parent=5 // pred_fallthru
        _
      %p705 = scmp.le.s32.totalorder 2, %s17
      // Predicated region
      $region45: #{tpu_custom_call.1} parent=5 // pred_check
        %p706 = pneg %p705
      $region46: #{tpu_custom_call.1} parent=5 // pred_check_branch
        %708 = sbr.rel (%p706) target = $region48
      $region47: #{tpu_custom_call.1} parent=5 // pred_region
        %s709 = ssub.s32 %s17, 2
        // Predicated region
        $region49: #{tpu_custom_call.1} parent=47 // pred_check
          %p710 = pneg %p165
        $region50: #{tpu_custom_call.1} parent=47 // pred_check_branch
          %712 = sbr.rel (%p710) target = $region52
        $region51: #{tpu_custom_call.1} parent=47 // pred_region
          %p713 = scmp.lt.s32.totalorder %s28, 1
          %s714 = scalar_select %p713, %s28, 1
          %p715 = scmp.lt.s32.totalorder %s29, 0
          %s716 = scalar_select %p715, %s29, 0
          %s717 = smul.addr %s716, 3
          %s718 = smul.addr %s714, 3
          %s719 = sadd.s32 %s717, %s718
          %s720 = smul.addr %s719, 8
          %s721 = scalar_lea.vmem %s5, %s720
        $region52: #{tpu_custom_call.1} parent=47 // pred_fallthru
          _
        // Predicated region
        $region53: #{tpu_custom_call.1} parent=47 // pred_check
          %p722 = pneg %p193
        $region54: #{tpu_custom_call.1} parent=47 // pred_check_branch
          %724 = sbr.rel (%p722) target = $region56
        $region55: #{tpu_custom_call.1} parent=47 // pred_region
          %s725 = sand.u32 %s178, 1
          %s726 = scalar_lea.sflag [#allocation5], %s725
          %s727 = sand.u32 %s178, 1
          %s728 = scalar_lea.vmem [#allocation4], %s727
          %730 = dma.done %s726, 16
        $region56: #{tpu_custom_call.1} parent=47 // pred_fallthru
          _
      $region48: #{tpu_custom_call.1} parent=5 // pred_fallthru
        _
    $region6: #{tpu_custom_call.1} parent=1 // loop_footer
      %s21 = sadd.s32 1, %s17
    $region7: #{tpu_custom_call.1} parent=1 // loop_footer_branch
      %16 = sbr.rel target = $region3
    $region8: #{tpu_custom_call.1} parent=1 // loop_exit
      _
    %731 = vsyncpa [#allocation5], 1
    %s732 = scalar_lea.sflag [#allocation5], 1
    %733 = vsyncpa %s732, 1

</llo_original>
